<compile_context>
chip_gen: v6e
topology: v6e:2x2x1
jax: 0.10.0
libtpu: 0.0.40
codegen_flags: <defaults>
</compile_context>

<pallas_src>
import functools

import jax
import jax.numpy as jnp
from jax.experimental import pallas as pl
from jax.experimental.pallas import tpu as pltpu


def _espcn_kernel(x_ref, w1_ref, b1_ref, w2_ref, b2_ref, w3_ref, b3_ref, o_ref, *, L):
    """One grid step = NB batch elements flattened into the lane axis.

    x_ref : (1, 1, NB*L) f32   input (NB length-L segments along lanes)
    w1_ref: (64, 8)      bf16  conv1 weights, column k = tap k (shift k-2), cols 5..7 zero
    w2_ref: (3, 32, 64)  bf16  conv2 per-tap weights (tap k = shift k-1)
    w3_ref: (3, r, 32)   bf16  conv3 per-tap weights (tap k = shift k-1)
    b*_ref: (C, 1)       f32   biases
    o_ref : (1, r, NB*L) f32   sigmoid(conv3(...)) before the sample shuffle
    """
    nbl = x_ref.shape[-1]
    f32 = jnp.float32
    bf16 = jnp.bfloat16

    # Position of every lane inside its length-L segment.  Multiplicative f32 edge
    # masks (hoisted, shared by all layers) zero taps that fall outside the segment
    # (== PyTorch zero padding) and stop neighbouring batch segments from leaking.
    pos = jax.lax.broadcasted_iota(jnp.int32, (1, nbl), 1) % L
    maskf = {d: ((pos >= -d) if d < 0 else (pos < L - d)).astype(f32)
             for d in (-2, -1, 1, 2)}

    def shifted(v, d):
        # shifted(v, d)[:, g] == v[:, g + d] inside the segment, else 0.   (f32 in/out)
        if d == 0:
            return v
        rolled = pltpu.roll(v, (-d) % nbl, axis=1)      # rolled[:, g] = v[:, g + d]
        return rolled * maskf[d]

    # ---- conv1: 1 -> 64, K=5, pad=2 : one (64,8)x(8,nbl) MXU dot, bias post-add ----
    x = x_ref[0]                                                       # (1, nbl) f32
    rows = [shifted(x, d) for d in (-2, -1, 0, 1, 2)]
    rows.append(jnp.zeros((3, nbl), f32))                              # zero K-pad rows
    xstack = jnp.concatenate(rows, axis=0).astype(bf16)                # (8, nbl) bf16
    h1 = jnp.tanh(jnp.dot(w1_ref[...], xstack, preferred_element_type=f32)
                  + b1_ref[...])                                       # (64, nbl) f32

    # ---- conv2: 64 -> 32, K=3, pad=1 : 3 accumulating per-tap dots ----
    acc2 = jnp.dot(w2_ref[1], h1.astype(bf16), preferred_element_type=f32)
    acc2 += jnp.dot(w2_ref[0], shifted(h1, -1).astype(bf16), preferred_element_type=f32)
    acc2 += jnp.dot(w2_ref[2], shifted(h1, 1).astype(bf16), preferred_element_type=f32)
    h2 = jnp.tanh(acc2 + b2_ref[...])                                  # (32, nbl) f32

    # ---- conv3: 32 -> r, K=3, pad=1 : 3 accumulating per-tap dots ----
    acc3 = jnp.dot(w3_ref[1], h2.astype(bf16), preferred_element_type=f32)
    acc3 += jnp.dot(w3_ref[0], shifted(h2, -1).astype(bf16), preferred_element_type=f32)
    acc3 += jnp.dot(w3_ref[2], shifted(h2, 1).astype(bf16), preferred_element_type=f32)

    # sigmoid is elementwise => applying it before SampleShuffle1D is identical.
    o_ref[0] = jax.nn.sigmoid(acc3 + b3_ref[...]).astype(o_ref.dtype)


def _pack_taps(w):
    """(Cout, Cin, K) -> (K, Cout, Cin) bf16, so w_ref[k] is the tap-k weight matrix."""
    return jnp.transpose(w, (2, 0, 1)).astype(jnp.bfloat16)


def espcn_1d_forward(x, params, upscale_factor, block_batch=2):
    """Forward pass matching ESPCN_1D.forward.  x: (N, 1, L) float32."""
    w1, b1, w2, b2, w3, b3 = params          # PyTorch Conv1d layout (Cout, Cin, K), (Cout,)
    N, cin, L = x.shape
    assert cin == 1
    r = upscale_factor

    # bf16 MXU weights; biases stay f32 and are added after each dot.
    w1p = jnp.pad(w1[:, 0, :], ((0, 0), (0, 3))).astype(jnp.bfloat16)   # (64, 8)
    w2p = _pack_taps(w2)                                                # (3, 32, 64)
    w3p = _pack_taps(w3)                                                # (3, r, 32)
    b1c = b1[:, None].astype(jnp.float32)                               # (64, 1)
    b2c = b2[:, None].astype(jnp.float32)                               # (32, 1)
    b3c = b3[:, None].astype(jnp.float32)                               # (r, 1)

    # Fold NB batch elements into the lane axis.  Keep G >= 2 when N >= 2 so both
    # v7x TensorCores get work, and keep NB*L modest so the f32 h1 (64 x NBL) plus
    # one rolled copy stays inside the 64-entry vreg file.
    if N >= 2:
        NB = max(1, min(block_batch, (N + 1) // 2))
    else:
        NB = N
    G = pl.cdiv(N, NB)
    N_pad = G * NB
    NBL = NB * L

    xf = x.reshape(N, L)                     # contiguous reshape (free)
    if N_pad != N:
        xf = jnp.concatenate([xf, jnp.zeros((N_pad - N, L), x.dtype)], axis=0)
    xb = xf.reshape(G, 1, NBL)               # contiguous reshape (free)

    conv_out = pl.pallas_call(
        functools.partial(_espcn_kernel, L=L),
        out_shape=jax.ShapeDtypeStruct((G, r, NBL), x.dtype),
        grid_spec=pl.GridSpec(
            grid=(G,),
            in_specs=[
                pl.BlockSpec((1, 1, NBL), lambda g: (g, 0, 0)),
                # Constant index maps keep the (tiny) weights/biases VMEM-resident.
                pl.BlockSpec(w1p.shape, lambda g: (0, 0)),
                pl.BlockSpec(b1c.shape, lambda g: (0, 0)),
                pl.BlockSpec(w2p.shape, lambda g: (0, 0, 0)),
                pl.BlockSpec(b2c.shape, lambda g: (0, 0)),
                pl.BlockSpec(w3p.shape, lambda g: (0, 0, 0)),
                pl.BlockSpec(b3c.shape, lambda g: (0, 0)),
            ],
            out_specs=pl.BlockSpec((1, r, NBL), lambda g: (g, 0, 0)),
        ),
        compiler_params=pltpu.CompilerParams(
            dimension_semantics=("parallel",)),
    )(xb, w1p, b1c, w2p, b2c, w3p, b3c)

    # TODO(synk): SampleShuffle1D interleave stays as wrapper-side layout glue; move the
    # r-interleave in-kernel (XLU lane shuffle) only if it shows up in production profiles.
    y = conv_out.reshape(G, r, NB, L)
    y = jnp.transpose(y, (0, 2, 3, 1)).reshape(N_pad, 1, r * L)
    return y[:N]


def init_params(key, upscale_factor):
    """Deterministic init mirroring ESPCN_1D.__init__ (PyTorch Conv1d layout)."""
    r = upscale_factor
    k1, k2, k3 = jax.random.split(key, 3)
    w1 = jax.random.normal(k1, (64, 1, 5), jnp.float32) * (2.0 / (64 * 5)) ** 0.5
    w2 = jax.random.normal(k2, (32, 64, 3), jnp.float32) * (2.0 / (32 * 3)) ** 0.5
    w3 = jax.random.normal(k3, (r, 32, 3), jnp.float32) * 0.001   # in_channels == 32
    b1 = jnp.zeros((64,), jnp.float32)
    b2 = jnp.zeros((32,), jnp.float32)
    b3 = jnp.zeros((r,), jnp.float32)
    return (w1, b1, w2, b2, w3, b3)


def espcn_1d_reference(x, params, upscale_factor):
    """Pure-JAX reference (lax.conv, f32) for correctness checking."""
    w1, b1, w2, b2, w3, b3 = params

    def conv1d(h, w, b, pad):
        y = jax.lax.conv_general_dilated(
            h, w, window_strides=(1,), padding=[(pad, pad)],
            dimension_numbers=("NCH", "OIH", "NCH"))
        return y + b.reshape(1, -1, 1)

    h1 = jnp.tanh(conv1d(x, w1, b1, 2))
    h2 = jnp.tanh(conv1d(h1, w2, b2, 1))
    h3 = conv1d(h2, w3, b3, 1)
    N, r, L = h3.shape
    return jax.nn.sigmoid(jnp.transpose(h3, (0, 2, 1)).reshape(N, 1, r * L))


if __name__ == "__main__":
    upscale_factor = 4
    N, L = 2, 128

    key = jax.random.PRNGKey(0)
    kp, kx = jax.random.split(key)
    params = init_params(kp, upscale_factor)
    x = jax.random.normal(kx, (N, 1, L), jnp.float32)

    fwd = jax.jit(functools.partial(espcn_1d_forward,
                                    upscale_factor=upscale_factor))
    y = fwd(x, params)
    jax.block_until_ready(y)

    y_ref = espcn_1d_reference(x, params, upscale_factor)
    assert y.shape == (N, 1, upscale_factor * L), y.shape
    max_err = float(jnp.max(jnp.abs(y - y_ref)))
    assert max_err < 1e-3, f"max abs error too large: {max_err}"

    print("KERNEL_OK")
</pallas_src>

<mosaic_0001>
module attributes {stable_mosaic.version = 11 : i64} {
  func.func @_espcn_kernel(%arg0: i32, %arg1: memref<1x1x128xf32, #tpu.memory_space<vmem>>, %arg2: memref<64x8xbf16, #tpu.memory_space<vmem>>, %arg3: memref<64x1xf32, #tpu.memory_space<vmem>>, %arg4: memref<3x32x64xbf16, #tpu.memory_space<vmem>>, %arg5: memref<32x1xf32, #tpu.memory_space<vmem>>, %arg6: memref<3x4x32xbf16, #tpu.memory_space<vmem>>, %arg7: memref<4x1xf32, #tpu.memory_space<vmem>>, %arg8: memref<1x4x128xf32, #tpu.memory_space<vmem>>) attributes {dimension_semantics = [#tpu.dimension_semantics<parallel>], iteration_bounds = array<i64: 2>, scalar_prefetch = 0 : i64, scratch_operands = 0 : i64, tpu.core_type = #tpu.core_type<tc>, window_params = [{transform_indices = @transform_0, window_bounds = array<i64: 1, 1, 128>}, {pipeline_mode = #tpu.pipeline_mode<synchronous>, transform_indices = @transform_1, window_bounds = array<i64: 64, 8>}, {pipeline_mode = #tpu.pipeline_mode<synchronous>, transform_indices = @transform_2, window_bounds = array<i64: 64, 1>}, {pipeline_mode = #tpu.pipeline_mode<synchronous>, transform_indices = @transform_3, window_bounds = array<i64: 3, 32, 64>}, {pipeline_mode = #tpu.pipeline_mode<synchronous>, transform_indices = @transform_4, window_bounds = array<i64: 32, 1>}, {pipeline_mode = #tpu.pipeline_mode<synchronous>, transform_indices = @transform_5, window_bounds = array<i64: 3, 4, 32>}, {pipeline_mode = #tpu.pipeline_mode<synchronous>, transform_indices = @transform_6, window_bounds = array<i64: 4, 1>}, {transform_indices = @transform_7, window_bounds = array<i64: 1, 4, 128>}]} {
    %0 = tpu.iota {dimensions = array<i32: 1>} : vector<1x128xi32>
    %c128_i32 = arith.constant 128 : i32
    %c0_i32 = arith.constant 0 : i32
    %1 = arith.cmpi eq, %c128_i32, %c0_i32 : i32
    %c1_i32 = arith.constant 1 : i32
    %2 = arith.select %1, %c1_i32, %c128_i32 : i32
    %3 = vector.broadcast %2 : i32 to vector<1x128xi32>
    %4 = arith.remsi %0, %3 : vector<1x128xi32>
    %c0_i32_0 = arith.constant 0 : i32
    %5 = vector.broadcast %c0_i32_0 : i32 to vector<1x128xi32>
    %6 = arith.cmpi ne, %4, %5 : vector<1x128xi32>
    %c0_i32_1 = arith.constant 0 : i32
    %7 = vector.broadcast %c0_i32_1 : i32 to vector<1x128xi32>
    %8 = arith.cmpi slt, %4, %7 : vector<1x128xi32>
    %c0_i32_2 = arith.constant 0 : i32
    %9 = arith.cmpi slt, %2, %c0_i32_2 : i32
    %10 = vector.broadcast %9 : i1 to vector<1x128xi1>
    %11 = vector.broadcast %10 : vector<1x128xi1> to vector<1x128xi1>
    %12 = arith.xori %8, %11 : vector<1x128xi1>
    %13 = arith.andi %12, %6 : vector<1x128xi1>
    %14 = vector.broadcast %2 : i32 to vector<1x128xi32>
    %15 = arith.addi %4, %14 : vector<1x128xi32>
    %16 = arith.select %13, %15, %4 : vector<1x128xi1>, vector<1x128xi32>
    %c2_i32 = arith.constant 2 : i32
    %17 = vector.broadcast %c2_i32 : i32 to vector<1x128xi32>
    %18 = arith.cmpi sge, %16, %17 : vector<1x128xi32>
    %19 = arith.extui %18 : vector<1x128xi1> to vector<1x128xi32>
    %20 = arith.sitofp %19 : vector<1x128xi32> to vector<1x128xf32>
    %c1_i32_3 = arith.constant 1 : i32
    %21 = vector.broadcast %c1_i32_3 : i32 to vector<1x128xi32>
    %22 = arith.cmpi sge, %16, %21 : vector<1x128xi32>
    %23 = arith.extui %22 : vector<1x128xi1> to vector<1x128xi32>
    %24 = arith.sitofp %23 : vector<1x128xi32> to vector<1x128xf32>
    %c127_i32 = arith.constant 127 : i32
    %25 = vector.broadcast %c127_i32 : i32 to vector<1x128xi32>
    %26 = arith.cmpi slt, %16, %25 : vector<1x128xi32>
    %27 = arith.extui %26 : vector<1x128xi1> to vector<1x128xi32>
    %28 = arith.sitofp %27 : vector<1x128xi32> to vector<1x128xf32>
    %c126_i32 = arith.constant 126 : i32
    %29 = vector.broadcast %c126_i32 : i32 to vector<1x128xi32>
    %30 = arith.cmpi slt, %16, %29 : vector<1x128xi32>
    %31 = arith.extui %30 : vector<1x128xi1> to vector<1x128xi32>
    %32 = arith.sitofp %31 : vector<1x128xi32> to vector<1x128xf32>
    %c0 = arith.constant 0 : index
    %c0_4 = arith.constant 0 : index
    %c0_5 = arith.constant 0 : index
    %33 = vector.load %arg1[%c0, %c0_4, %c0_5] : memref<1x1x128xf32, #tpu.memory_space<vmem>>, vector<1x1x128xf32>
    %34 = vector.shape_cast %33 : vector<1x1x128xf32> to vector<1x128xf32>
    %c2_i32_6 = arith.constant 2 : i32
    %35 = tpu.dynamic_rotate %34 by %c2_i32_6 dim 1 : vector<1x128xf32>, i32 -> vector<1x128xf32>
    %36 = arith.mulf %35, %20 : vector<1x128xf32>
    %c1_i32_7 = arith.constant 1 : i32
    %37 = tpu.dynamic_rotate %34 by %c1_i32_7 dim 1 : vector<1x128xf32>, i32 -> vector<1x128xf32>
    %38 = arith.mulf %37, %24 : vector<1x128xf32>
    %c127_i32_8 = arith.constant 127 : i32
    %39 = tpu.dynamic_rotate %34 by %c127_i32_8 dim 1 : vector<1x128xf32>, i32 -> vector<1x128xf32>
    %40 = arith.mulf %39, %28 : vector<1x128xf32>
    %c126_i32_9 = arith.constant 126 : i32
    %41 = tpu.dynamic_rotate %34 by %c126_i32_9 dim 1 : vector<1x128xf32>, i32 -> vector<1x128xf32>
    %42 = arith.mulf %41, %32 : vector<1x128xf32>
    %cst = arith.constant 0.000000e+00 : f32
    %43 = vector.broadcast %cst : f32 to vector<3x128xf32>
    %44 = tpu.concatenate %36, %38, %34, %40, %42, %43 in 0 : vector<1x128xf32>, vector<1x128xf32>, vector<1x128xf32>, vector<1x128xf32>, vector<1x128xf32>, vector<3x128xf32> -> vector<8x128xf32>
    %45 = arith.truncf %44 : vector<8x128xf32> to vector<8x128xbf16>
    %c0_10 = arith.constant 0 : index
    %c0_11 = arith.constant 0 : index
    %46 = vector.load %arg2[%c0_10, %c0_11] : memref<64x8xbf16, #tpu.memory_space<vmem>>, vector<64x8xbf16>
    %cst_12 = arith.constant dense<0.000000e+00> : vector<64x128xf32>
    %47 = tpu.matmul %46, %45, %cst_12 {dimension_numbers = #tpu.dot_dimension_numbers<[1], [0], [0], [1], [0, 0, 1, 1], [], []>} : vector<64x8xbf16>, vector<8x128xbf16>, vector<64x128xf32> -> vector<64x128xf32>
    %c0_13 = arith.constant 0 : index
    %c0_14 = arith.constant 0 : index
    %48 = vector.load %arg3[%c0_13, %c0_14] : memref<64x1xf32, #tpu.memory_space<vmem>>, vector<64x1xf32>
    %49 = vector.broadcast %48 : vector<64x1xf32> to vector<64x128xf32>
    %50 = arith.addf %47, %49 : vector<64x128xf32>
    %51 = math.tanh %50 : vector<64x128xf32>
    %c1 = arith.constant 1 : index
    %c0_15 = arith.constant 0 : index
    %c0_16 = arith.constant 0 : index
    %52 = vector.load %arg4[%c1, %c0_15, %c0_16] : memref<3x32x64xbf16, #tpu.memory_space<vmem>>, vector<1x32x64xbf16>
    %53 = vector.shape_cast %52 : vector<1x32x64xbf16> to vector<32x64xbf16>
    %54 = arith.truncf %51 : vector<64x128xf32> to vector<64x128xbf16>
    %cst_17 = arith.constant dense<0.000000e+00> : vector<32x128xf32>
    %55 = tpu.matmul %53, %54, %cst_17 {dimension_numbers = #tpu.dot_dimension_numbers<[1], [0], [0], [1], [0, 0, 1, 1], [], []>} : vector<32x64xbf16>, vector<64x128xbf16>, vector<32x128xf32> -> vector<32x128xf32>
    %c0_18 = arith.constant 0 : index
    %c0_19 = arith.constant 0 : index
    %c0_20 = arith.constant 0 : index
    %56 = vector.load %arg4[%c0_18, %c0_19, %c0_20] : memref<3x32x64xbf16, #tpu.memory_space<vmem>>, vector<1x32x64xbf16>
    %57 = vector.shape_cast %56 : vector<1x32x64xbf16> to vector<32x64xbf16>
    %c1_i32_21 = arith.constant 1 : i32
    %58 = tpu.dynamic_rotate %51 by %c1_i32_21 dim 1 : vector<64x128xf32>, i32 -> vector<64x128xf32>
    %59 = vector.broadcast %24 : vector<1x128xf32> to vector<64x128xf32>
    %60 = arith.mulf %58, %59 : vector<64x128xf32>
    %61 = arith.truncf %60 : vector<64x128xf32> to vector<64x128xbf16>
    %cst_22 = arith.constant dense<0.000000e+00> : vector<32x128xf32>
    %62 = tpu.matmul %57, %61, %cst_22 {dimension_numbers = #tpu.dot_dimension_numbers<[1], [0], [0], [1], [0, 0, 1, 1], [], []>} : vector<32x64xbf16>, vector<64x128xbf16>, vector<32x128xf32> -> vector<32x128xf32>
    %63 = arith.addf %55, %62 : vector<32x128xf32>
    %c2 = arith.constant 2 : index
    %c0_23 = arith.constant 0 : index
    %c0_24 = arith.constant 0 : index
    %64 = vector.load %arg4[%c2, %c0_23, %c0_24] : memref<3x32x64xbf16, #tpu.memory_space<vmem>>, vector<1x32x64xbf16>
    %65 = vector.shape_cast %64 : vector<1x32x64xbf16> to vector<32x64xbf16>
    %c127_i32_25 = arith.constant 127 : i32
    %66 = tpu.dynamic_rotate %51 by %c127_i32_25 dim 1 : vector<64x128xf32>, i32 -> vector<64x128xf32>
    %67 = vector.broadcast %28 : vector<1x128xf32> to vector<64x128xf32>
    %68 = arith.mulf %66, %67 : vector<64x128xf32>
    %69 = arith.truncf %68 : vector<64x128xf32> to vector<64x128xbf16>
    %cst_26 = arith.constant dense<0.000000e+00> : vector<32x128xf32>
    %70 = tpu.matmul %65, %69, %cst_26 {dimension_numbers = #tpu.dot_dimension_numbers<[1], [0], [0], [1], [0, 0, 1, 1], [], []>} : vector<32x64xbf16>, vector<64x128xbf16>, vector<32x128xf32> -> vector<32x128xf32>
    %71 = arith.addf %63, %70 : vector<32x128xf32>
    %c0_27 = arith.constant 0 : index
    %c0_28 = arith.constant 0 : index
    %72 = vector.load %arg5[%c0_27, %c0_28] : memref<32x1xf32, #tpu.memory_space<vmem>>, vector<32x1xf32>
    %73 = vector.broadcast %72 : vector<32x1xf32> to vector<32x128xf32>
    %74 = arith.addf %71, %73 : vector<32x128xf32>
    %75 = math.tanh %74 : vector<32x128xf32>
    %c1_29 = arith.constant 1 : index
    %c0_30 = arith.constant 0 : index
    %c0_31 = arith.constant 0 : index
    %76 = vector.load %arg6[%c1_29, %c0_30, %c0_31] : memref<3x4x32xbf16, #tpu.memory_space<vmem>>, vector<1x4x32xbf16>
    %77 = vector.shape_cast %76 : vector<1x4x32xbf16> to vector<4x32xbf16>
    %78 = arith.truncf %75 : vector<32x128xf32> to vector<32x128xbf16>
    %cst_32 = arith.constant dense<0.000000e+00> : vector<4x128xf32>
    %79 = tpu.matmul %77, %78, %cst_32 {dimension_numbers = #tpu.dot_dimension_numbers<[1], [0], [0], [1], [0, 0, 1, 1], [], []>} : vector<4x32xbf16>, vector<32x128xbf16>, vector<4x128xf32> -> vector<4x128xf32>
    %c0_33 = arith.constant 0 : index
    %c0_34 = arith.constant 0 : index
    %c0_35 = arith.constant 0 : index
    %80 = vector.load %arg6[%c0_33, %c0_34, %c0_35] : memref<3x4x32xbf16, #tpu.memory_space<vmem>>, vector<1x4x32xbf16>
    %81 = vector.shape_cast %80 : vector<1x4x32xbf16> to vector<4x32xbf16>
    %c1_i32_36 = arith.constant 1 : i32
    %82 = tpu.dynamic_rotate %75 by %c1_i32_36 dim 1 : vector<32x128xf32>, i32 -> vector<32x128xf32>
    %83 = vector.broadcast %24 : vector<1x128xf32> to vector<32x128xf32>
    %84 = arith.mulf %82, %83 : vector<32x128xf32>
    %85 = arith.truncf %84 : vector<32x128xf32> to vector<32x128xbf16>
    %cst_37 = arith.constant dense<0.000000e+00> : vector<4x128xf32>
    %86 = tpu.matmul %81, %85, %cst_37 {dimension_numbers = #tpu.dot_dimension_numbers<[1], [0], [0], [1], [0, 0, 1, 1], [], []>} : vector<4x32xbf16>, vector<32x128xbf16>, vector<4x128xf32> -> vector<4x128xf32>
    %87 = arith.addf %79, %86 : vector<4x128xf32>
    %c2_38 = arith.constant 2 : index
    %c0_39 = arith.constant 0 : index
    %c0_40 = arith.constant 0 : index
    %88 = vector.load %arg6[%c2_38, %c0_39, %c0_40] : memref<3x4x32xbf16, #tpu.memory_space<vmem>>, vector<1x4x32xbf16>
    %89 = vector.shape_cast %88 : vector<1x4x32xbf16> to vector<4x32xbf16>
    %c127_i32_41 = arith.constant 127 : i32
    %90 = tpu.dynamic_rotate %75 by %c127_i32_41 dim 1 : vector<32x128xf32>, i32 -> vector<32x128xf32>
    %91 = vector.broadcast %28 : vector<1x128xf32> to vector<32x128xf32>
    %92 = arith.mulf %90, %91 : vector<32x128xf32>
    %93 = arith.truncf %92 : vector<32x128xf32> to vector<32x128xbf16>
    %cst_42 = arith.constant dense<0.000000e+00> : vector<4x128xf32>
    %94 = tpu.matmul %89, %93, %cst_42 {dimension_numbers = #tpu.dot_dimension_numbers<[1], [0], [0], [1], [0, 0, 1, 1], [], []>} : vector<4x32xbf16>, vector<32x128xbf16>, vector<4x128xf32> -> vector<4x128xf32>
    %95 = arith.addf %87, %94 : vector<4x128xf32>
    %c0_43 = arith.constant 0 : index
    %c0_44 = arith.constant 0 : index
    %96 = vector.load %arg7[%c0_43, %c0_44] : memref<4x1xf32, #tpu.memory_space<vmem>>, vector<4x1xf32>
    %97 = vector.broadcast %96 : vector<4x1xf32> to vector<4x128xf32>
    %98 = arith.addf %95, %97 : vector<4x128xf32>
    %99 = arith.negf %98 : vector<4x128xf32>
    %100 = math.exp %99 : vector<4x128xf32>
    %cst_45 = arith.constant 1.000000e+00 : f32
    %101 = vector.broadcast %cst_45 : f32 to vector<4x128xf32>
    %102 = arith.addf %101, %100 : vector<4x128xf32>
    %103 = arith.divf %101, %102 : vector<4x128xf32>
    %c0_46 = arith.constant 0 : index
    %c0_47 = arith.constant 0 : index
    %c0_48 = arith.constant 0 : index
    %104 = vector.load %arg8[%c0_46, %c0_47, %c0_48] : memref<1x4x128xf32, #tpu.memory_space<vmem>>, vector<1x4x128xf32>
    %105 = vector.shape_cast %104 : vector<1x4x128xf32> to vector<4x128xf32>
    %106 = vector.shape_cast %103 : vector<4x128xf32> to vector<1x4x128xf32>
    tpu.vector_store %arg8[%c0_46, %c0_47, %c0_48], %106 {strides = array<i32>} : memref<1x4x128xf32, #tpu.memory_space<vmem>>, vector<1x4x128xf32>,
    return
  }
  func.func @transform_0(%arg0: i32) -> (i32, i32, i32) {
    %c0_i32 = arith.constant 0 : i32
    %c0_i32_0 = arith.constant 0 : i32
    %c0_i32_1 = arith.constant 0 : i32
    return %arg0, %c0_i32, %c0_i32_0 : i32, i32, i32
  }
  func.func @transform_1(%arg0: i32) -> (i32, i32) {
    %c0_i32 = arith.constant 0 : i32
    %c0_i32_0 = arith.constant 0 : i32
    %c0_i32_1 = arith.constant 0 : i32
    return %c0_i32, %c0_i32_0 : i32, i32
  }
  func.func @transform_2(%arg0: i32) -> (i32, i32) {
    %c0_i32 = arith.constant 0 : i32
    %c0_i32_0 = arith.constant 0 : i32
    %c0_i32_1 = arith.constant 0 : i32
    return %c0_i32, %c0_i32_0 : i32, i32
  }
  func.func @transform_3(%arg0: i32) -> (i32, i32, i32) {
    %c0_i32 = arith.constant 0 : i32
    %c0_i32_0 = arith.constant 0 : i32
    %c0_i32_1 = arith.constant 0 : i32
    %c0_i32_2 = arith.constant 0 : i32
    return %c0_i32, %c0_i32_0, %c0_i32_1 : i32, i32, i32
  }
  func.func @transform_4(%arg0: i32) -> (i32, i32) {
    %c0_i32 = arith.constant 0 : i32
    %c0_i32_0 = arith.constant 0 : i32
    %c0_i32_1 = arith.constant 0 : i32
    return %c0_i32, %c0_i32_0 : i32, i32
  }
  func.func @transform_5(%arg0: i32) -> (i32, i32, i32) {
    %c0_i32 = arith.constant 0 : i32
    %c0_i32_0 = arith.constant 0 : i32
    %c0_i32_1 = arith.constant 0 : i32
    %c0_i32_2 = arith.constant 0 : i32
    return %c0_i32, %c0_i32_0, %c0_i32_1 : i32, i32, i32
  }
  func.func @transform_6(%arg0: i32) -> (i32, i32) {
    %c0_i32 = arith.constant 0 : i32
    %c0_i32_0 = arith.constant 0 : i32
    %c0_i32_1 = arith.constant 0 : i32
    return %c0_i32, %c0_i32_0 : i32, i32
  }
  func.func @transform_7(%arg0: i32) -> (i32, i32, i32) {
    %c0_i32 = arith.constant 0 : i32
    %c0_i32_0 = arith.constant 0 : i32
    %c0_i32_1 = arith.constant 0 : i32
    return %arg0, %c0_i32, %c0_i32_0 : i32, i32, i32
  }
}

</mosaic_0001>

<llo_original>
// kernel: espcn_1d_forward.1
$region0: #{espcn_1d_forward.1}
  #allocation0 [shape = 'u32[]', space=smem, size = 0x4, offset = 0x4, fixed_abs, tag = 'smem constant byte address 0x4 - core index']
  #allocation1 [shape = 'u32[144,128]{1,0:T(1,128)}', space=vmem, size = 0x12000, scoped, tag = 'internal scratch']
  %s0 = inlined_call_operand.vmem [shape: f32[2,1,128], index: 0, kind: input, shape index: {}]
  %s1 = inlined_call_operand.vmem [shape: bf16[64,8], index: 1, kind: input, shape index: {}]
  %s2 = inlined_call_operand.vmem [shape: f32[64,1], index: 2, kind: input, shape index: {}]
  %s3 = inlined_call_operand.vmem [shape: bf16[3,32,64], index: 3, kind: input, shape index: {}]
  %s4 = inlined_call_operand.vmem [shape: f32[32,1], index: 4, kind: input, shape index: {}]
  %s5 = inlined_call_operand.vmem [shape: bf16[3,4,32], index: 5, kind: input, shape index: {}]
  %s6 = inlined_call_operand.vmem [shape: f32[4,1], index: 6, kind: input, shape index: {}]
  %s7 = inlined_call_operand.vmem [shape: f32[2,4,128], index: 7, kind: output, shape index: {}]
  %s8 = sld [smem:[#allocation0]]
  $region61: #{espcn_1d_forward.1} parent=0
    _
  %s10 = ssub.s32 1, %s8
  %s11 = scalar_select 0, %s10, %s8
  loop: start=0, step=1, limit=4
  $region2: #{espcn_1d_forward.1} parent=0 // loop_pre_header
    _
  $region3: #{espcn_1d_forward.1} parent=0 // loop_header
    %s13 = sphi 0, %s17
    %p14 = scmp.ge.s32.totalorder %s13, 4
    %s23 = sphi 0, %s25
    %s26 = sphi 0, %s23
    %s27 = sphi 0, %s26
    %s43 = sphi 0, %s27
    %s47 = sphi 0, %s47
    %s49 = sphi 0, %s47
    %s50 = sphi 0, %s49
    %s64 = sphi 0, %s50
    %s68 = sphi 0, %s68
    %s70 = sphi 0, %s68
    %s71 = sphi 0, %s70
    %s85 = sphi 0, %s71
    %s89 = sphi 0, %s89
    %s91 = sphi 0, %s89
    %s92 = sphi 0, %s91
    %s106 = sphi 0, %s92
    %s110 = sphi 0, %s110
    %s112 = sphi 0, %s110
    %s113 = sphi 0, %s112
    %s127 = sphi 0, %s113
    %s131 = sphi 0, %s131
    %s133 = sphi 0, %s131
    %s134 = sphi 0, %s133
    %s148 = sphi 0, %s134
    %s152 = sphi 0, %s152
    %s154 = sphi 0, %s152
    %s155 = sphi 0, %s154
    %s169 = sphi 0, %s155
    %s175 = sphi 0, %s177
    %s178 = sphi 0, %s175
    %s179 = sphi 0, %s178
    %s195 = sphi 0, %s179
  $region4: #{espcn_1d_forward.1} parent=0 // loop_header_branch
    %16 = sbr.rel (%p14) target = $region8
  $region5: #{espcn_1d_forward.1} parent=0 // loop_body
    %s18 = ssub.s32 %s13, 1
    %s19 = ssub.s32 %s13, 2
    %s20 = sadd.s32 %s13, 1
    %s21 = ssub.s32 %s13, %s20
    %p22 = scmp.eq.s32.totalorder %s21, 0
    %s24 = sadd.s32 %s23, 1
    %s25 = scalar_select %p22, %s23, %s24
    %p28 = pneg %p22
    %p29 = scmp.eq.s32.totalorder %s13, 1
    %p30 = por %p28, %p29
    %p31 = scmp.ne.s32.totalorder %s23, %s26
    %p32 = scmp.eq.s32.totalorder %s13, 0
    %p33 = por %p31, %p32
    %p34 = scmp.ne.s32.totalorder %s23, %s26
    %p35 = scmp.eq.s32.totalorder %s18, 1
    %p36 = por %p34, %p35
    %p37 = scmp.ne.s32.totalorder %s26, %s27
    %p38 = scmp.eq.s32.totalorder %s18, 0
    %p39 = por %p37, %p38
    %p40 = scmp.ne.s32.totalorder %s26, %s27
    %p41 = scmp.eq.s32.totalorder %s19, 1
    %p42 = por %p40, %p41
    %p44 = scmp.ne.s32.totalorder %s27, %s43
    %p45 = scmp.eq.s32.totalorder %s19, 0
    %p46 = por %p44, %p45
    %s48 = sadd.s32 %s47, 1
    %p51 = scmp.eq.s32.totalorder %s13, 1
    %p52 = scmp.ne.s32.totalorder %s47, %s49
    %p53 = scmp.eq.s32.totalorder %s13, 0
    %p54 = por %p52, %p53
    %p55 = scmp.ne.s32.totalorder %s47, %s49
    %p56 = scmp.eq.s32.totalorder %s18, 1
    %p57 = por %p55, %p56
    %p58 = scmp.ne.s32.totalorder %s49, %s50
    %p59 = scmp.eq.s32.totalorder %s18, 0
    %p60 = por %p58, %p59
    %p61 = scmp.ne.s32.totalorder %s49, %s50
    %p62 = scmp.eq.s32.totalorder %s19, 1
    %p63 = por %p61, %p62
    %p65 = scmp.ne.s32.totalorder %s50, %s64
    %p66 = scmp.eq.s32.totalorder %s19, 0
    %p67 = por %p65, %p66
    %s69 = sadd.s32 %s68, 1
    %p72 = scmp.eq.s32.totalorder %s13, 1
    %p73 = scmp.ne.s32.totalorder %s68, %s70
    %p74 = scmp.eq.s32.totalorder %s13, 0
    %p75 = por %p73, %p74
    %p76 = scmp.ne.s32.totalorder %s68, %s70
    %p77 = scmp.eq.s32.totalorder %s18, 1
    %p78 = por %p76, %p77
    %p79 = scmp.ne.s32.totalorder %s70, %s71
    %p80 = scmp.eq.s32.totalorder %s18, 0
    %p81 = por %p79, %p80
    %p82 = scmp.ne.s32.totalorder %s70, %s71
    %p83 = scmp.eq.s32.totalorder %s19, 1
    %p84 = por %p82, %p83
    %p86 = scmp.ne.s32.totalorder %s71, %s85
    %p87 = scmp.eq.s32.totalorder %s19, 0
    %p88 = por %p86, %p87
    %s90 = sadd.s32 %s89, 1
    %p93 = scmp.eq.s32.totalorder %s13, 1
    %p94 = scmp.ne.s32.totalorder %s89, %s91
    %p95 = scmp.eq.s32.totalorder %s13, 0
    %p96 = por %p94, %p95
    %p97 = scmp.ne.s32.totalorder %s89, %s91
    %p98 = scmp.eq.s32.totalorder %s18, 1
    %p99 = por %p97, %p98
    %p100 = scmp.ne.s32.totalorder %s91, %s92
    %p101 = scmp.eq.s32.totalorder %s18, 0
    %p102 = por %p100, %p101
    %p103 = scmp.ne.s32.totalorder %s91, %s92
    %p104 = scmp.eq.s32.totalorder %s19, 1
    %p105 = por %p103, %p104
    %p107 = scmp.ne.s32.totalorder %s92, %s106
    %p108 = scmp.eq.s32.totalorder %s19, 0
    %p109 = por %p107, %p108
    %s111 = sadd.s32 %s110, 1
    %p114 = scmp.eq.s32.totalorder %s13, 1
    %p115 = scmp.ne.s32.totalorder %s110, %s112
    %p116 = scmp.eq.s32.totalorder %s13, 0
    %p117 = por %p115, %p116
    %p118 = scmp.ne.s32.totalorder %s110, %s112
    %p119 = scmp.eq.s32.totalorder %s18, 1
    %p120 = por %p118, %p119
    %p121 = scmp.ne.s32.totalorder %s112, %s113
    %p122 = scmp.eq.s32.totalorder %s18, 0
    %p123 = por %p121, %p122
    %p124 = scmp.ne.s32.totalorder %s112, %s113
    %p125 = scmp.eq.s32.totalorder %s19, 1
    %p126 = por %p124, %p125
    %p128 = scmp.ne.s32.totalorder %s113, %s127
    %p129 = scmp.eq.s32.totalorder %s19, 0
    %p130 = por %p128, %p129
    %s132 = sadd.s32 %s131, 1
    %p135 = scmp.eq.s32.totalorder %s13, 1
    %p136 = scmp.ne.s32.totalorder %s131, %s133
    %p137 = scmp.eq.s32.totalorder %s13, 0
    %p138 = por %p136, %p137
    %p139 = scmp.ne.s32.totalorder %s131, %s133
    %p140 = scmp.eq.s32.totalorder %s18, 1
    %p141 = por %p139, %p140
    %p142 = scmp.ne.s32.totalorder %s133, %s134
    %p143 = scmp.eq.s32.totalorder %s18, 0
    %p144 = por %p142, %p143
    %p145 = scmp.ne.s32.totalorder %s133, %s134
    %p146 = scmp.eq.s32.totalorder %s19, 1
    %p147 = por %p145, %p146
    %p149 = scmp.ne.s32.totalorder %s134, %s148
    %p150 = scmp.eq.s32.totalorder %s19, 0
    %p151 = por %p149, %p150
    %s153 = sadd.s32 %s152, 1
    %p156 = scmp.eq.s32.totalorder %s13, 1
    %p157 = scmp.ne.s32.totalorder %s152, %s154
    %p158 = scmp.eq.s32.totalorder %s13, 0
    %p159 = por %p157, %p158
    %p160 = scmp.ne.s32.totalorder %s152, %s154
    %p161 = scmp.eq.s32.totalorder %s18, 1
    %p162 = por %p160, %p161
    %p163 = scmp.ne.s32.totalorder %s154, %s155
    %p164 = scmp.eq.s32.totalorder %s18, 0
    %p165 = por %p163, %p164
    %p166 = scmp.ne.s32.totalorder %s154, %s155
    %p167 = scmp.eq.s32.totalorder %s19, 1
    %p168 = por %p166, %p167
    %p170 = scmp.ne.s32.totalorder %s155, %s169
    %p171 = scmp.eq.s32.totalorder %s19, 0
    %p172 = por %p170, %p171
    %s173 = ssub.s32 %s13, %s20
    %p174 = scmp.eq.s32.totalorder %s173, 0
    %s176 = sadd.s32 %s175, 1
    %s177 = scalar_select %p174, %s175, %s176
    %p180 = pneg %p174
    %p181 = scmp.eq.s32.totalorder %s13, 1
    %p182 = por %p180, %p181
    %p183 = scmp.ne.s32.totalorder %s175, %s178
    %p184 = scmp.eq.s32.totalorder %s13, 0
    %p185 = por %p183, %p184
    %p186 = scmp.ne.s32.totalorder %s175, %s178
    %p187 = scmp.eq.s32.totalorder %s18, 1
    %p188 = por %p186, %p187
    %p189 = scmp.ne.s32.totalorder %s178, %s179
    %p190 = scmp.eq.s32.totalorder %s18, 0
    %p191 = por %p189, %p190
    %p192 = scmp.ne.s32.totalorder %s178, %s179
    %p193 = scmp.eq.s32.totalorder %s19, 1
    %p194 = por %p192, %p193
    %p196 = scmp.ne.s32.totalorder %s179, %s195
    %p197 = scmp.eq.s32.totalorder %s19, 0
    %p198 = por %p196, %p197
    %p199 = scmp.le.s32.totalorder 1, %s13
    %p200 = scmp.lt.s32.totalorder %s13, 3
    %p201 = pnand %p199, %p200
    %p202 = pneg %p201
    // Predicated region
    $region9: #{espcn_1d_forward.1} parent=5 // pred_check
      _
    $region10: #{espcn_1d_forward.1} parent=5 // pred_check_branch
      %204 = sbr.rel (%p201) target = $region12
    $region11: #{espcn_1d_forward.1} parent=5 // pred_region
      %s205 = ssub.s32 %s13, 1
      // Predicated region
      $region13: #{espcn_1d_forward.1} parent=11 // pred_check
        %p206 = pneg %p60
      $region14: #{espcn_1d_forward.1} parent=11 // pred_check_branch
        %208 = sbr.rel (%p206) target = $region16
      $region15: #{espcn_1d_forward.1} parent=11 // pred_region
        _
      $region16: #{espcn_1d_forward.1} parent=11 // pred_fallthru
        _
      // Predicated region
      $region17: #{espcn_1d_forward.1} parent=11 // pred_check
        %p209 = pneg %p81
      $region18: #{espcn_1d_forward.1} parent=11 // pred_check_branch
        %211 = sbr.rel (%p209) target = $region20
      $region19: #{espcn_1d_forward.1} parent=11 // pred_region
        _
      $region20: #{espcn_1d_forward.1} parent=11 // pred_fallthru
        _
      // Predicated region
      $region21: #{espcn_1d_forward.1} parent=11 // pred_check
        %p212 = pneg %p102
      $region22: #{espcn_1d_forward.1} parent=11 // pred_check_branch
        %214 = sbr.rel (%p212) target = $region24
      $region23: #{espcn_1d_forward.1} parent=11 // pred_region
        _
      $region24: #{espcn_1d_forward.1} parent=11 // pred_fallthru
        _
      // Predicated region
      $region25: #{espcn_1d_forward.1} parent=11 // pred_check
        %p215 = pneg %p123
      $region26: #{espcn_1d_forward.1} parent=11 // pred_check_branch
        %217 = sbr.rel (%p215) target = $region28
      $region27: #{espcn_1d_forward.1} parent=11 // pred_region
        _
      $region28: #{espcn_1d_forward.1} parent=11 // pred_fallthru
        _
      // Predicated region
      $region29: #{espcn_1d_forward.1} parent=11 // pred_check
        %p218 = pneg %p144
      $region30: #{espcn_1d_forward.1} parent=11 // pred_check_branch
        %220 = sbr.rel (%p218) target = $region32
      $region31: #{espcn_1d_forward.1} parent=11 // pred_region
        _
      $region32: #{espcn_1d_forward.1} parent=11 // pred_fallthru
        _
      // Predicated region
      $region33: #{espcn_1d_forward.1} parent=11 // pred_check
        %p221 = pneg %p165
      $region34: #{espcn_1d_forward.1} parent=11 // pred_check_branch
        %223 = sbr.rel (%p221) target = $region36
      $region35: #{espcn_1d_forward.1} parent=11 // pred_region
        _
      $region36: #{espcn_1d_forward.1} parent=11 // pred_fallthru
        _
    $region12: #{espcn_1d_forward.1} parent=5 // pred_fallthru
      _
    %p224 = scmp.lt.s32.totalorder %s13, 2
    // Predicated region
    $region37: #{espcn_1d_forward.1} parent=5 // pred_check
      %p225 = pneg %p224
    $region38: #{espcn_1d_forward.1} parent=5 // pred_check_branch
      %227 = sbr.rel (%p225) target = $region40
    $region39: #{espcn_1d_forward.1} parent=5 // pred_region
      // Predicated region
      $region41: #{espcn_1d_forward.1} parent=39 // pred_check
        %p228 = pneg %p33
      $region42: #{espcn_1d_forward.1} parent=39 // pred_check_branch
        %230 = sbr.rel (%p228) target = $region44
      $region43: #{espcn_1d_forward.1} parent=39 // pred_region
        %p231 = scmp.lt.s32.totalorder %s13, 1
        %s232 = scalar_select %p231, %s13, 1
        %s233 = scalar_lea.vmem %s0, %s232
      $region44: #{espcn_1d_forward.1} parent=39 // pred_fallthru
        _
    $region40: #{espcn_1d_forward.1} parent=5 // pred_fallthru
      _
    %p234 = scmp.le.s32.totalorder 1, %s13
    %p235 = scmp.lt.s32.totalorder %s13, 3
    %p236 = pnand %p234, %p235
    %p237 = pneg %p236
    // Predicated region
    $region45: #{espcn_1d_forward.1} parent=5 // pred_check
      _
    $region46: #{espcn_1d_forward.1} parent=5 // pred_check_branch
      %239 = sbr.rel (%p236) target = $region48
    $region47: #{espcn_1d_forward.1} parent=5 // pred_region
      %s240 = ssub.s32 %s13, 1
      %p241 = scmp.lt.s32.totalorder %s18, 1
      %s242 = scalar_select %p241, %s18, 1
      %s243 = scalar_lea.vmem %s0, %s242
      %p244 = pneg %p39
      %p245 = pneg %p36
      %p246 = pneg %p60
      %p247 = pneg %p57
      %p248 = pneg %p81
      %p249 = pneg %p78
      %p250 = pneg %p102
      %p251 = pneg %p99
      %p252 = pneg %p123
      %p253 = pneg %p120
      %p254 = pneg %p144
      %p255 = pneg %p141
      %p256 = pneg %p165
      %p257 = pneg %p162
      %p258 = pneg %p191
      %p259 = pneg %p188
      %p260 = scmp.lt.s32.totalorder %s18, 1
      %s261 = scalar_select %p260, %s18, 1
      %s262 = smul.addr %s261, 4
      %s263 = scalar_lea.vmem %s7, %s262
      %p264 = scmp.lt.s32.totalorder %s18, 1
      %s265 = scalar_select %p264, %s18, 1
      %s266 = scalar_lea.vmem %s0, %s265
      %p267 = scmp.lt.s32.totalorder %s18, 1
      %s268 = scalar_select %p267, %s18, 1
      %s269 = smul.addr %s268, 4
      %s270 = scalar_lea.vmem %s7, %s269
      %v272 = vlaneseq
      %v273 = vand.u32 %v272, 127
      %vm274 = vcmp.lt.s32.totalorder %v273, 0
      %v275 = vsub.s32 0, %v273
      %v276 = vsel %vm274, %v275, %v273
      %v277 = vshrl.u32 %v276, 7
      %v278 = vand.u32 %v276, 127
      %v279 = vsub.s32 0, %v278
      %v280 = vsel %vm274, %v279, %v278
      %vm281 = vcmp.ne.s32.totalorder %v280, 0
      %vm282 = vcmp.lt.s32.totalorder %v280, 0
      %vm283 = vmand %vm282, %vm281
      %v284 = vadd.s32 %v280, 128
      %v285 = vsel %vm283, %v284, %v280
      %vm286 = vcmp.ge.s32.totalorder %v285, 2
      %v287 = vsel %vm286, 1, 0
      %v288 = vcvt.s32.f32 %v287
      %vm289 = vcmp.ge.s32.totalorder %v285, 1
      %v290 = vsel %vm289, 1, 0
      %v291 = vcvt.s32.f32 %v290
      %vm292 = vcmp.lt.s32.totalorder %v285, 127
      %v293 = vsel %vm292, 1, 0
      %v294 = vcvt.s32.f32 %v293
      %vm295 = vcmp.lt.s32.totalorder %v285, 126
      %v296 = vsel %vm295, 1, 0
      %v297 = vcvt.s32.f32 %v296
      %v298 = vld [vmem:[%s266] sm:$0x1]
      %299 = vrot.lane.b32.xlu0 %v298, 2
      %v300 = vpop.permute.xlu0 %299
      %v301 = vmul.f32 %v300, %v288
      %302 = vrot.lane.b32.xlu0 %v298, 1
      %v303 = vpop.permute.xlu0 %302
      %v304 = vmul.f32 %v303, %v291
      %305 = vrot.lane.b32.xlu0 %v298, 127
      %v306 = vpop.permute.xlu0 %305
      %v307 = vmul.f32 %v306, %v294
      %308 = vrot.lane.b32.xlu0 %v298, 126
      %v309 = vpop.permute.xlu0 %308
      %v310 = vmul.f32 %v309, %v297
      %v312 = vrot.slane %v304, 7
      %v315 = vlaneseq
      %v316 = vshrl.u32 %v315, 7
      %v317 = vsub.s32 0, %v316
      %v318 = vrot.slane %v298, %v317
      %v321 = vrot.slane %v307, 5
      %v324 = vrot.slane %v310, 4
      %vm326 = vcmask 1040384
      %v327 = vsel %vm326, %v301, %v312
      %vm328 = vcmask 1041408
      %v329 = vsel %vm328, %v327, %v318
      %vm330 = vcmask 1042432
      %v331 = vsel %vm330, %v329, %v321
      %vm332 = vcmask 1043456
      %v333 = vsel %vm332, %v331, %v324
      %vm334 = vcmask 1044480
      %v335 = vsel %vm334, %v333, 0.0
      %v336 = vpack.c.bf16 %v335, %v335
      %v337 = vld [vmem:[%s1] sm:$0xf]
      %v338 = vld [vmem:[%s1 + $0x4] sm:$0xf]
      %v339 = vld [vmem:[%s1 + $0x8] sm:$0xf]
      %v340 = vld [vmem:[%s1 + $0xc] sm:$0xf]
      %v341 = vld [vmem:[%s1 + $0x10] sm:$0xf]
      %v342 = vld [vmem:[%s1 + $0x14] sm:$0xf]
      %v343 = vld [vmem:[%s1 + $0x18] sm:$0xf]
      %v344 = vld [vmem:[%s1 + $0x1c] sm:$0xf]
      %v345 = vld [vmem:[%s2] sm:$0xff]
      %v346 = vld [vmem:[%s2 + $0x8] sm:$0xff]
      %v347 = vld [vmem:[%s2 + $0x10] sm:$0xff]
      %v348 = vld [vmem:[%s2 + $0x18] sm:$0xff]
      %v349 = vld [vmem:[%s2 + $0x20] sm:$0xff]
      %v350 = vld [vmem:[%s2 + $0x28] sm:$0xff]
      %v351 = vld [vmem:[%s2 + $0x30] sm:$0xff]
      %v352 = vld [vmem:[%s2 + $0x38] sm:$0xff]
      %354 = vset.pattern.permute.xlu0 0
      %355 = vperm.xlu0 %354, %v345
      %v356 = vpop.permute.xlu0 %355
      %359 = vset.pattern.permute.xlu0 0
      %360 = vperm.xlu0 %359, %v346
      %v361 = vpop.permute.xlu0 %360
      %364 = vset.pattern.permute.xlu0 0
      %365 = vperm.xlu0 %364, %v347
      %v366 = vpop.permute.xlu0 %365
      %369 = vset.pattern.permute.xlu0 0
      %370 = vperm.xlu0 %369, %v348
      %v371 = vpop.permute.xlu0 %370
      %374 = vset.pattern.permute.xlu0 0
      %375 = vperm.xlu0 %374, %v349
      %v376 = vpop.permute.xlu0 %375
      %379 = vset.pattern.permute.xlu0 0
      %380 = vperm.xlu0 %379, %v350
      %v381 = vpop.permute.xlu0 %380
      %384 = vset.pattern.permute.xlu0 0
      %385 = vperm.xlu0 %384, %v351
      %v386 = vpop.permute.xlu0 %385
      %389 = vset.pattern.permute.xlu0 0
      %390 = vperm.xlu0 %389, %v352
      %v391 = vpop.permute.xlu0 %390
      %v401 = vunpack.c.l.b16 %v337
      %v402 = vunpack.c.l.b16 %v338
      %v403 = vunpack.c.l.b16 %v339
      %v404 = vunpack.c.l.b16 %v340
      %v405 = vunpack.c.l.b16 %v341
      %v406 = vunpack.c.l.b16 %v342
      %v407 = vunpack.c.l.b16 %v343
      %v408 = vunpack.c.l.b16 %v344
      %v409 = vpack.c.b16 %v402, %v401
      %v410 = vpack.c.b16 %v404, %v403
      %v411 = vpack.c.b16 %v406, %v405
      %v412 = vpack.c.b16 %v408, %v407
      %vm413 = vcmask 64512
      %v415 = vsel %vm413, %v409, 0
      %v418 = vsel %vm413, %v410, 0
      %v421 = vsel %vm413, %v411, 0
      %v424 = vsel %vm413, %v412, 0
      %v427 = vsel %vm332, %v336, 0
      %429 = vmatprep.subr.bf16.mxu0 0
      %430 = vmatpush1.bf16.msra.mxu0 0
      %431 = vmatprep.subr.bf16.mxu0 0
      %432 = vmatpush1.bf16.msra.mxu0 0
      %433 = vmatprep.subr.bf16.mxu0 0
      %434 = vmatpush1.bf16.msra.mxu0 0
      %435 = vmatprep.subr.bf16.mxu0 0
      %436 = vmatpush1.bf16.msra.mxu0 0
      %437 = vmatprep.subr.bf16.mxu0 0
      %438 = vmatpush1.bf16.msra.mxu0 0
      %439 = vmatprep.subr.bf16.mxu0 0
      %440 = vmatpush1.bf16.msra.mxu0 0
      %441 = vmatprep.subr.bf16.mxu0 0
      %442 = vmatpush1.bf16.msra.mxu0 0
      %443 = vmatprep.subr.bf16.mxu0 0
      %444 = vmatpush1.bf16.msra.mxu0 %v427
      %445 = vmatprep.subr.bf16.mxu0 0
      %446 = vmatpush2.bf16.msra.mxu0 0
      %447 = vmatprep.subr.bf16.mxu0 0
      %448 = vmatpush2.bf16.msra.mxu0 0
      %449 = vmatprep.subr.bf16.mxu0 0
      %450 = vmatpush2.bf16.msra.mxu0 0
      %451 = vmatprep.subr.bf16.mxu0 0
      %452 = vmatpush2.bf16.msra.mxu0 0
      %453 = vmatprep.subr.bf16.mxu0 0
      %454 = vmatpush2.bf16.msra.mxu0 0
      %455 = vmatprep.subr.bf16.mxu0 0
      %456 = vmatpush2.bf16.msra.mxu0 0
      %457 = vmatprep.subr.bf16.mxu0 0
      %458 = vmatpush2.bf16.msra.mxu0 0
      %459 = vmatprep.subr.bf16.mxu0 0
      %460 = vmatpush2.bf16.msra.mxu0 0
      %461 = vmatprep.mubr.bf16.mxu0 0
      %462 = vmatmul.mubr.bf16.gmra.mxu0 %v415
      %v463 = vpop.f32.mrf.mxu0
      %v464 = vadd.f32 %v356, %v463
      %v465 = vpop.f32.mrf.mxu0
      %v466 = vpop.f32.mrf.mxu0
      %v467 = vadd.f32 %v361, %v466
      %v468 = vpop.f32.mrf.mxu0
      %469 = vmatprep.mubr.bf16.mxu0 0
      %470 = vmatmul.mubr.bf16.gmra.mxu0 %v418
      %v471 = vpop.f32.mrf.mxu0
      %v472 = vadd.f32 %v366, %v471
      %v473 = vpop.f32.mrf.mxu0
      %v474 = vpop.f32.mrf.mxu0
      %v475 = vadd.f32 %v371, %v474
      %v476 = vpop.f32.mrf.mxu0
      %477 = vmatprep.mubr.bf16.mxu0 0
      %478 = vmatmul.mubr.bf16.gmra.mxu0 %v421
      %v479 = vpop.f32.mrf.mxu0
      %v480 = vadd.f32 %v376, %v479
      %v481 = vpop.f32.mrf.mxu0
      %v482 = vpop.f32.mrf.mxu0
      %v483 = vadd.f32 %v381, %v482
      %v484 = vpop.f32.mrf.mxu0
      %485 = vmatprep.mubr.bf16.mxu0 0
      %486 = vmatmul.mubr.bf16.gmra.mxu0 %v424
      %v487 = vpop.f32.mrf.mxu0
      %v488 = vadd.f32 %v386, %v487
      %v489 = vpop.f32.mrf.mxu0
      %v490 = vpop.f32.mrf.mxu0
      %v491 = vadd.f32 %v391, %v490
      %v492 = vpop.f32.mrf.mxu0
      %493 = vdwg.mxu0
      %v494 = vtanh.pop %v464
      %v495 = vtanh.pop %v467
      %v496 = vtanh.pop %v472
      %v497 = vtanh.pop %v475
      %v498 = vtanh.pop %v480
      %v499 = vtanh.pop %v483
      %v500 = vtanh.pop %v488
      %v501 = vtanh.pop %v491
      %s502 = scalar_lea.vmem %s3, 16
      %v503 = vld [vmem:[%s502] sm:$0xf]
      %v504 = vld [vmem:[%s502 + $0x4] sm:$0xf]
      %v505 = vld [vmem:[%s502 + $0x8] sm:$0xf]
      %v506 = vld [vmem:[%s502 + $0xc] sm:$0xf]
      %v507 = vpack.c.bf16 %v495, %v494
      %v508 = vpack.c.bf16 %v497, %v496
      %v509 = vpack.c.bf16 %v499, %v498
      %v510 = vpack.c.bf16 %v501, %v500
      %v511 = vld [vmem:[%s3] sm:$0xf]
      %v512 = vld [vmem:[%s3 + $0x4] sm:$0xf]
      %v513 = vld [vmem:[%s3 + $0x8] sm:$0xf]
      %v514 = vld [vmem:[%s3 + $0xc] sm:$0xf]
      %515 = vrot.lane.b32.xlu0 %v494, 1
      %v516 = vpop.permute.xlu0 %515
      %517 = vrot.lane.b32.xlu0 %v495, 1
      %v518 = vpop.permute.xlu0 %517
      %519 = vrot.lane.b32.xlu0 %v496, 1
      %v520 = vpop.permute.xlu0 %519
      %521 = vrot.lane.b32.xlu0 %v497, 1
      %v522 = vpop.permute.xlu0 %521
      %523 = vrot.lane.b32.xlu0 %v498, 1
      %v524 = vpop.permute.xlu0 %523
      %525 = vrot.lane.b32.xlu0 %v499, 1
      %v526 = vpop.permute.xlu0 %525
      %527 = vrot.lane.b32.xlu0 %v500, 1
      %v528 = vpop.permute.xlu0 %527
      %529 = vrot.lane.b32.xlu0 %v501, 1
      %v530 = vpop.permute.xlu0 %529
      %v531 = vmul.f32 %v516, %v291
      %v532 = vmul.f32 %v518, %v291
      %v533 = vmul.f32 %v520, %v291
      %v534 = vmul.f32 %v522, %v291
      %v535 = vmul.f32 %v524, %v291
      %v536 = vmul.f32 %v526, %v291
      %v537 = vmul.f32 %v528, %v291
      %v538 = vmul.f32 %v530, %v291
      %v539 = vpack.c.bf16 %v532, %v531
      %v540 = vpack.c.bf16 %v534, %v533
      %v541 = vpack.c.bf16 %v536, %v535
      %v542 = vpack.c.bf16 %v538, %v537
      %v547 = vunpack.c.l.b16 %v511
      %v548 = vunpack.c.l.b16 %v512
      %v549 = vunpack.c.l.b16 %v513
      %v550 = vunpack.c.l.b16 %v514
      %v551 = vpack.c.b16 %v548, %v547
      %v552 = vpack.c.b16 %v550, %v549
      %vm553 = vcmask 523264
      %v555 = vsel %vm553, %v551, 0
      %v558 = vsel %vm553, %v552, 0
      %560 = vmatprep.subr.bf16.mxu0 0
      %561 = vmatpush1.bf16.msra.mxu0 0
      %562 = vmatprep.subr.bf16.mxu0 0
      %563 = vmatpush1.bf16.msra.mxu0 0
      %564 = vmatprep.subr.bf16.mxu0 0
      %565 = vmatpush1.bf16.msra.mxu0 0
      %566 = vmatprep.subr.bf16.mxu0 0
      %567 = vmatpush1.bf16.msra.mxu0 0
      %568 = vmatprep.subr.bf16.mxu0 0
      %569 = vmatpush1.bf16.msra.mxu0 %v542
      %570 = vmatprep.subr.bf16.mxu0 0
      %571 = vmatpush1.bf16.msra.mxu0 %v541
      %572 = vmatprep.subr.bf16.mxu0 0
      %573 = vmatpush1.bf16.msra.mxu0 %v540
      %574 = vmatprep.subr.bf16.mxu0 0
      %575 = vmatpush1.bf16.msra.mxu0 %v539
      %576 = vmatprep.subr.bf16.mxu0 0
      %577 = vmatpush2.bf16.msra.mxu0 0
      %578 = vmatprep.subr.bf16.mxu0 0
      %579 = vmatpush2.bf16.msra.mxu0 0
      %580 = vmatprep.subr.bf16.mxu0 0
      %581 = vmatpush2.bf16.msra.mxu0 0
      %582 = vmatprep.subr.bf16.mxu0 0
      %583 = vmatpush2.bf16.msra.mxu0 0
      %584 = vmatprep.subr.bf16.mxu0 0
      %585 = vmatpush2.bf16.msra.mxu0 0
      %586 = vmatprep.subr.bf16.mxu0 0
      %587 = vmatpush2.bf16.msra.mxu0 0
      %588 = vmatprep.subr.bf16.mxu0 0
      %589 = vmatpush2.bf16.msra.mxu0 0
      %590 = vmatprep.subr.bf16.mxu0 0
      %591 = vmatpush2.bf16.msra.mxu0 0
      %592 = vmatprep.mubr.bf16.mxu0 0
      %593 = vmatmul.mubr.bf16.gmra.mxu0 %v555
      %v594 = vpop.f32.mrf.mxu0
      %v595 = vadd.f32 0.0, %v594
      %v596 = vpop.f32.mrf.mxu0
      %v597 = vpop.f32.mrf.mxu0
      %v598 = vadd.f32 0.0, %v597
      %v599 = vpop.f32.mrf.mxu0
      %600 = vmatprep.mubr.bf16.mxu0 0
      %601 = vmatmul.mubr.bf16.gmra.mxu0 %v558
      %v602 = vpop.f32.mrf.mxu0
      %v603 = vadd.f32 0.0, %v602
      %v604 = vpop.f32.mrf.mxu0
      %v605 = vpop.f32.mrf.mxu0
      %v606 = vadd.f32 0.0, %v605
      %v607 = vpop.f32.mrf.mxu0
      %608 = vdwg.mxu0
      %v613 = vunpack.c.l.b16 %v503
      %v614 = vunpack.c.l.b16 %v504
      %v615 = vunpack.c.l.b16 %v505
      %v616 = vunpack.c.l.b16 %v506
      %v617 = vpack.c.b16 %v614, %v613
      %v618 = vpack.c.b16 %v616, %v615
      %v620 = vsel %vm553, %v617, 0
      %v623 = vsel %vm553, %v618, 0
      %625 = vmatprep.subr.bf16.mxu0 0
      %626 = vmatpush1.bf16.msra.mxu0 0
      %627 = vmatprep.subr.bf16.mxu0 0
      %628 = vmatpush1.bf16.msra.mxu0 0
      %629 = vmatprep.subr.bf16.mxu0 0
      %630 = vmatpush1.bf16.msra.mxu0 0
      %631 = vmatprep.subr.bf16.mxu0 0
      %632 = vmatpush1.bf16.msra.mxu0 0
      %633 = vmatprep.subr.bf16.mxu0 0
      %634 = vmatpush1.bf16.msra.mxu0 %v510
      %635 = vmatprep.subr.bf16.mxu0 0
      %636 = vmatpush1.bf16.msra.mxu0 %v509
      %637 = vmatprep.subr.bf16.mxu0 0
      %638 = vmatpush1.bf16.msra.mxu0 %v508
      %639 = vmatprep.subr.bf16.mxu0 0
      %640 = vmatpush1.bf16.msra.mxu0 %v507
      %641 = vmatprep.subr.bf16.mxu0 0
      %642 = vmatpush2.bf16.msra.mxu0 0
      %643 = vmatprep.subr.bf16.mxu0 0
      %644 = vmatpush2.bf16.msra.mxu0 0
      %645 = vmatprep.subr.bf16.mxu0 0
      %646 = vmatpush2.bf16.msra.mxu0 0
      %647 = vmatprep.subr.bf16.mxu0 0
      %648 = vmatpush2.bf16.msra.mxu0 0
      %649 = vmatprep.subr.bf16.mxu0 0
      %650 = vmatpush2.bf16.msra.mxu0 0
      %651 = vmatprep.subr.bf16.mxu0 0
      %652 = vmatpush2.bf16.msra.mxu0 0
      %653 = vmatprep.subr.bf16.mxu0 0
      %654 = vmatpush2.bf16.msra.mxu0 0
      %655 = vmatprep.subr.bf16.mxu0 0
      %656 = vmatpush2.bf16.msra.mxu0 0
      %657 = vmatprep.mubr.bf16.mxu0 0
      %658 = vmatmul.mubr.bf16.gmra.mxu0 %v620
      %v659 = vpop.f32.mrf.mxu0
      %v660 = vadd.f32 %v595, %v659
      %v661 = vpop.f32.mrf.mxu0
      %v662 = vpop.f32.mrf.mxu0
      %v663 = vadd.f32 %v598, %v662
      %v664 = vpop.f32.mrf.mxu0
      %665 = vmatprep.mubr.bf16.mxu0 0
      %666 = vmatmul.mubr.bf16.gmra.mxu0 %v623
      %v667 = vpop.f32.mrf.mxu0
      %v668 = vadd.f32 %v603, %v667
      %v669 = vpop.f32.mrf.mxu0
      %v670 = vpop.f32.mrf.mxu0
      %v671 = vadd.f32 %v606, %v670
      %v672 = vpop.f32.mrf.mxu0
      %673 = vdwg.mxu0
      %s674 = scalar_lea.vmem %s3, 32
      %v675 = vld [vmem:[%s674] sm:$0xf]
      %v676 = vld [vmem:[%s674 + $0x4] sm:$0xf]
      %v677 = vld [vmem:[%s674 + $0x8] sm:$0xf]
      %v678 = vld [vmem:[%s674 + $0xc] sm:$0xf]
      %679 = vrot.lane.b32.xlu0 %v494, 127
      %v680 = vpop.permute.xlu0 %679
      %681 = vrot.lane.b32.xlu0 %v495, 127
      %v682 = vpop.permute.xlu0 %681
      %683 = vrot.lane.b32.xlu0 %v496, 127
      %v684 = vpop.permute.xlu0 %683
      %685 = vrot.lane.b32.xlu0 %v497, 127
      %v686 = vpop.permute.xlu0 %685
      %687 = vrot.lane.b32.xlu0 %v498, 127
      %v688 = vpop.permute.xlu0 %687
      %689 = vrot.lane.b32.xlu0 %v499, 127
      %v690 = vpop.permute.xlu0 %689
      %691 = vrot.lane.b32.xlu0 %v500, 127
      %v692 = vpop.permute.xlu0 %691
      %693 = vrot.lane.b32.xlu0 %v501, 127
      %v694 = vpop.permute.xlu0 %693
      %v695 = vmul.f32 %v680, %v294
      %v696 = vmul.f32 %v682, %v294
      %v697 = vmul.f32 %v684, %v294
      %v698 = vmul.f32 %v686, %v294
      %v699 = vmul.f32 %v688, %v294
      %v700 = vmul.f32 %v690, %v294
      %v701 = vmul.f32 %v692, %v294
      %v702 = vmul.f32 %v694, %v294
      %v703 = vpack.c.bf16 %v696, %v695
      %v704 = vpack.c.bf16 %v698, %v697
      %v705 = vpack.c.bf16 %v700, %v699
      %v706 = vpack.c.bf16 %v702, %v701
      %v711 = vunpack.c.l.b16 %v675
      %v712 = vunpack.c.l.b16 %v676
      %v713 = vunpack.c.l.b16 %v677
      %v714 = vunpack.c.l.b16 %v678
      %v715 = vpack.c.b16 %v712, %v711
      %v716 = vpack.c.b16 %v714, %v713
      %v718 = vsel %vm553, %v715, 0
      %v721 = vsel %vm553, %v716, 0
      %723 = vmatprep.subr.bf16.mxu0 0
      %724 = vmatpush1.bf16.msra.mxu0 0
      %725 = vmatprep.subr.bf16.mxu0 0
      %726 = vmatpush1.bf16.msra.mxu0 0
      %727 = vmatprep.subr.bf16.mxu0 0
      %728 = vmatpush1.bf16.msra.mxu0 0
      %729 = vmatprep.subr.bf16.mxu0 0
      %730 = vmatpush1.bf16.msra.mxu0 0
      %731 = vmatprep.subr.bf16.mxu0 0
      %732 = vmatpush1.bf16.msra.mxu0 %v706
      %733 = vmatprep.subr.bf16.mxu0 0
      %734 = vmatpush1.bf16.msra.mxu0 %v705
      %735 = vmatprep.subr.bf16.mxu0 0
      %736 = vmatpush1.bf16.msra.mxu0 %v704
      %737 = vmatprep.subr.bf16.mxu0 0
      %738 = vmatpush1.bf16.msra.mxu0 %v703
      %739 = vmatprep.subr.bf16.mxu0 0
      %740 = vmatpush2.bf16.msra.mxu0 0
      %741 = vmatprep.subr.bf16.mxu0 0
      %742 = vmatpush2.bf16.msra.mxu0 0
      %743 = vmatprep.subr.bf16.mxu0 0
      %744 = vmatpush2.bf16.msra.mxu0 0
      %745 = vmatprep.subr.bf16.mxu0 0
      %746 = vmatpush2.bf16.msra.mxu0 0
      %747 = vmatprep.subr.bf16.mxu0 0
      %748 = vmatpush2.bf16.msra.mxu0 0
      %749 = vmatprep.subr.bf16.mxu0 0
      %750 = vmatpush2.bf16.msra.mxu0 0
      %751 = vmatprep.subr.bf16.mxu0 0
      %752 = vmatpush2.bf16.msra.mxu0 0
      %753 = vmatprep.subr.bf16.mxu0 0
      %754 = vmatpush2.bf16.msra.mxu0 0
      %755 = vmatprep.mubr.bf16.mxu0 0
      %756 = vmatmul.mubr.bf16.gmra.mxu0 %v718
      %v757 = vpop.f32.mrf.mxu0
      %v758 = vadd.f32 0.0, %v757
      %v759 = vpop.f32.mrf.mxu0
      %v760 = vpop.f32.mrf.mxu0
      %v761 = vadd.f32 0.0, %v760
      %v762 = vpop.f32.mrf.mxu0
      %763 = vmatprep.mubr.bf16.mxu0 0
      %764 = vmatmul.mubr.bf16.gmra.mxu0 %v721
      %v765 = vpop.f32.mrf.mxu0
      %v766 = vadd.f32 0.0, %v765
      %v767 = vpop.f32.mrf.mxu0
      %v768 = vpop.f32.mrf.mxu0
      %v769 = vadd.f32 0.0, %v768
      %v770 = vpop.f32.mrf.mxu0
      %771 = vdwg.mxu0
      %v772 = vadd.f32 %v660, %v758
      %v773 = vadd.f32 %v663, %v761
      %v774 = vadd.f32 %v668, %v766
      %v775 = vadd.f32 %v671, %v769
      %v776 = vld [vmem:[%s4] sm:$0xff]
      %v777 = vld [vmem:[%s4 + $0x8] sm:$0xff]
      %v778 = vld [vmem:[%s4 + $0x10] sm:$0xff]
      %v779 = vld [vmem:[%s4 + $0x18] sm:$0xff]
      %781 = vset.pattern.permute.xlu0 0
      %782 = vperm.xlu0 %781, %v776
      %v783 = vpop.permute.xlu0 %782
      %786 = vset.pattern.permute.xlu0 0
      %787 = vperm.xlu0 %786, %v777
      %v788 = vpop.permute.xlu0 %787
      %791 = vset.pattern.permute.xlu0 0
      %792 = vperm.xlu0 %791, %v778
      %v793 = vpop.permute.xlu0 %792
      %796 = vset.pattern.permute.xlu0 0
      %797 = vperm.xlu0 %796, %v779
      %v798 = vpop.permute.xlu0 %797
      %v800 = vadd.f32 %v772, %v783
      %v801 = vadd.f32 %v773, %v788
      %v802 = vadd.f32 %v774, %v793
      %v803 = vadd.f32 %v775, %v798
      %v804 = vtanh.pop %v800
      %v805 = vtanh.pop %v801
      %v806 = vtanh.pop %v802
      %v807 = vtanh.pop %v803
      %s808 = scalar_lea.vmem %s5, 2
      %v809 = vld [vmem:[%s808] sm:$0x3]
      %v810 = vpack.c.bf16 %v805, %v804
      %v811 = vpack.c.bf16 %v807, %v806
      %v812 = vld [vmem:[%s5] sm:$0x3]
      %813 = vrot.lane.b32.xlu0 %v804, 1
      %v814 = vpop.permute.xlu0 %813
      %815 = vrot.lane.b32.xlu0 %v805, 1
      %v816 = vpop.permute.xlu0 %815
      %817 = vrot.lane.b32.xlu0 %v806, 1
      %v818 = vpop.permute.xlu0 %817
      %819 = vrot.lane.b32.xlu0 %v807, 1
      %v820 = vpop.permute.xlu0 %819
      %v821 = vmul.f32 %v814, %v291
      %v822 = vmul.f32 %v816, %v291
      %v823 = vmul.f32 %v818, %v291
      %v824 = vmul.f32 %v820, %v291
      %v825 = vpack.c.bf16 %v822, %v821
      %v826 = vpack.c.bf16 %v824, %v823
      %vm827 = vcmask 261120
      %v829 = vsel %vm827, %v812, 0
      %831 = vmatprep.subr.bf16.mxu0 0
      %832 = vmatpush1.bf16.msra.mxu0 0
      %833 = vmatprep.subr.bf16.mxu0 0
      %834 = vmatpush1.bf16.msra.mxu0 0
      %835 = vmatprep.subr.bf16.mxu0 0
      %836 = vmatpush1.bf16.msra.mxu0 0
      %837 = vmatprep.subr.bf16.mxu0 0
      %838 = vmatpush1.bf16.msra.mxu0 0
      %839 = vmatprep.subr.bf16.mxu0 0
      %840 = vmatpush1.bf16.msra.mxu0 0
      %841 = vmatprep.subr.bf16.mxu0 0
      %842 = vmatpush1.bf16.msra.mxu0 0
      %843 = vmatprep.subr.bf16.mxu0 0
      %844 = vmatpush1.bf16.msra.mxu0 %v826
      %845 = vmatprep.subr.bf16.mxu0 0
      %846 = vmatpush1.bf16.msra.mxu0 %v825
      %847 = vmatprep.subr.bf16.mxu0 0
      %848 = vmatpush2.bf16.msra.mxu0 0
      %849 = vmatprep.subr.bf16.mxu0 0
      %850 = vmatpush2.bf16.msra.mxu0 0
      %851 = vmatprep.subr.bf16.mxu0 0
      %852 = vmatpush2.bf16.msra.mxu0 0
      %853 = vmatprep.subr.bf16.mxu0 0
      %854 = vmatpush2.bf16.msra.mxu0 0
      %855 = vmatprep.subr.bf16.mxu0 0
      %856 = vmatpush2.bf16.msra.mxu0 0
      %857 = vmatprep.subr.bf16.mxu0 0
      %858 = vmatpush2.bf16.msra.mxu0 0
      %859 = vmatprep.subr.bf16.mxu0 0
      %860 = vmatpush2.bf16.msra.mxu0 0
      %861 = vmatprep.subr.bf16.mxu0 0
      %862 = vmatpush2.bf16.msra.mxu0 0
      %863 = vmatprep.mubr.bf16.mxu0 0
      %864 = vmatmul.mubr.bf16.gmra.mxu0 %v829
      %v865 = vpop.f32.mrf.mxu0
      %v866 = vadd.f32 0.0, %v865
      %v867 = vpop.f32.mrf.mxu0
      %v868 = vpop.f32.mrf.mxu0
      %v869 = vpop.f32.mrf.mxu0
      %870 = vdwg.mxu0
      %v872 = vsel %vm827, %v809, 0
      %874 = vmatprep.subr.bf16.mxu0 0
      %875 = vmatpush1.bf16.msra.mxu0 0
      %876 = vmatprep.subr.bf16.mxu0 0
      %877 = vmatpush1.bf16.msra.mxu0 0
      %878 = vmatprep.subr.bf16.mxu0 0
      %879 = vmatpush1.bf16.msra.mxu0 0
      %880 = vmatprep.subr.bf16.mxu0 0
      %881 = vmatpush1.bf16.msra.mxu0 0
      %882 = vmatprep.subr.bf16.mxu0 0
      %883 = vmatpush1.bf16.msra.mxu0 0
      %884 = vmatprep.subr.bf16.mxu0 0
      %885 = vmatpush1.bf16.msra.mxu0 0
      %886 = vmatprep.subr.bf16.mxu0 0
      %887 = vmatpush1.bf16.msra.mxu0 %v811
      %888 = vmatprep.subr.bf16.mxu0 0
      %889 = vmatpush1.bf16.msra.mxu0 %v810
      %890 = vmatprep.subr.bf16.mxu0 0
      %891 = vmatpush2.bf16.msra.mxu0 0
      %892 = vmatprep.subr.bf16.mxu0 0
      %893 = vmatpush2.bf16.msra.mxu0 0
      %894 = vmatprep.subr.bf16.mxu0 0
      %895 = vmatpush2.bf16.msra.mxu0 0
      %896 = vmatprep.subr.bf16.mxu0 0
      %897 = vmatpush2.bf16.msra.mxu0 0
      %898 = vmatprep.subr.bf16.mxu0 0
      %899 = vmatpush2.bf16.msra.mxu0 0
      %900 = vmatprep.subr.bf16.mxu0 0
      %901 = vmatpush2.bf16.msra.mxu0 0
      %902 = vmatprep.subr.bf16.mxu0 0
      %903 = vmatpush2.bf16.msra.mxu0 0
      %904 = vmatprep.subr.bf16.mxu0 0
      %905 = vmatpush2.bf16.msra.mxu0 0
      %906 = vmatprep.mubr.bf16.mxu0 0
      %907 = vmatmul.mubr.bf16.gmra.mxu0 %v872
      %v908 = vpop.f32.mrf.mxu0
      %v909 = vadd.f32 %v866, %v908
      %v910 = vpop.f32.mrf.mxu0
      %v911 = vpop.f32.mrf.mxu0
      %v912 = vpop.f32.mrf.mxu0
      %913 = vdwg.mxu0
      %s914 = scalar_lea.vmem %s5, 4
      %v915 = vld [vmem:[%s914] sm:$0x3]
      %916 = vrot.lane.b32.xlu0 %v804, 127
      %v917 = vpop.permute.xlu0 %916
      %918 = vrot.lane.b32.xlu0 %v805, 127
      %v919 = vpop.permute.xlu0 %918
      %920 = vrot.lane.b32.xlu0 %v806, 127
      %v921 = vpop.permute.xlu0 %920
      %922 = vrot.lane.b32.xlu0 %v807, 127
      %v923 = vpop.permute.xlu0 %922
      %v924 = vmul.f32 %v917, %v294
      %v925 = vmul.f32 %v919, %v294
      %v926 = vmul.f32 %v921, %v294
      %v927 = vmul.f32 %v923, %v294
      %v928 = vpack.c.bf16 %v925, %v924
      %v929 = vpack.c.bf16 %v927, %v926
      %v931 = vsel %vm827, %v915, 0
      %933 = vmatprep.subr.bf16.mxu0 0
      %934 = vmatpush1.bf16.msra.mxu0 0
      %935 = vmatprep.subr.bf16.mxu0 0
      %936 = vmatpush1.bf16.msra.mxu0 0
      %937 = vmatprep.subr.bf16.mxu0 0
      %938 = vmatpush1.bf16.msra.mxu0 0
      %939 = vmatprep.subr.bf16.mxu0 0
      %940 = vmatpush1.bf16.msra.mxu0 0
      %941 = vmatprep.subr.bf16.mxu0 0
      %942 = vmatpush1.bf16.msra.mxu0 0
      %943 = vmatprep.subr.bf16.mxu0 0
      %944 = vmatpush1.bf16.msra.mxu0 0
      %945 = vmatprep.subr.bf16.mxu0 0
      %946 = vmatpush1.bf16.msra.mxu0 %v929
      %947 = vmatprep.subr.bf16.mxu0 0
      %948 = vmatpush1.bf16.msra.mxu0 %v928
      %949 = vmatprep.subr.bf16.mxu0 0
      %950 = vmatpush2.bf16.msra.mxu0 0
      %951 = vmatprep.subr.bf16.mxu0 0
      %952 = vmatpush2.bf16.msra.mxu0 0
      %953 = vmatprep.subr.bf16.mxu0 0
      %954 = vmatpush2.bf16.msra.mxu0 0
      %955 = vmatprep.subr.bf16.mxu0 0
      %956 = vmatpush2.bf16.msra.mxu0 0
      %957 = vmatprep.subr.bf16.mxu0 0
      %958 = vmatpush2.bf16.msra.mxu0 0
      %959 = vmatprep.subr.bf16.mxu0 0
      %960 = vmatpush2.bf16.msra.mxu0 0
      %961 = vmatprep.subr.bf16.mxu0 0
      %962 = vmatpush2.bf16.msra.mxu0 0
      %963 = vmatprep.subr.bf16.mxu0 0
      %964 = vmatpush2.bf16.msra.mxu0 0
      %965 = vmatprep.mubr.bf16.mxu0 0
      %966 = vmatmul.mubr.bf16.gmra.mxu0 %v931
      %v967 = vpop.f32.mrf.mxu0
      %v968 = vadd.f32 0.0, %v967
      %v969 = vpop.f32.mrf.mxu0
      %v970 = vpop.f32.mrf.mxu0
      %v971 = vpop.f32.mrf.mxu0
      %972 = vdwg.mxu0
      %v973 = vadd.f32 %v909, %v968
      %v974 = vld [vmem:[%s6] sm:$0xf]
      %976 = vset.pattern.permute.xlu0 0
      %977 = vperm.xlu0 %976, %v974
      %v978 = vpop.permute.xlu0 %977
      %v980 = vadd.f32 %v973, %v978
      %v981 = vxor.u32 %v980, 2147483648
      %v982 = vmul.f32 %v981, 1.442695
      %v983 = vpow.pop %v982
      %v984 = vadd.f32 %v983, 1.0
      %v985 = vrcp.pop %v984
      %v986 = vmul.f32 1.0, %v985
      %987 = vst [vmem:[%s270] sm:$0xf] %v986
      %p988 = scmp.lt.s32.totalorder %s18, 1
      %s989 = scalar_select %p988, %s18, 1
      %s990 = smul.addr %s989, 4
      %s991 = scalar_lea.vmem %s7, %s990
      // Predicated region
      $region49: #{espcn_1d_forward.1} parent=47 // pred_check
        %p992 = pneg %p188
      $region50: #{espcn_1d_forward.1} parent=47 // pred_check_branch
        %994 = sbr.rel (%p992) target = $region52
      $region51: #{espcn_1d_forward.1} parent=47 // pred_region
        _
      $region52: #{espcn_1d_forward.1} parent=47 // pred_fallthru
        _
    $region48: #{espcn_1d_forward.1} parent=5 // pred_fallthru
      _
    %p995 = scmp.le.s32.totalorder 2, %s13
    // Predicated region
    $region53: #{espcn_1d_forward.1} parent=5 // pred_check
      %p996 = pneg %p995
    $region54: #{espcn_1d_forward.1} parent=5 // pred_check_branch
      %998 = sbr.rel (%p996) target = $region56
    $region55: #{espcn_1d_forward.1} parent=5 // pred_region
      %s999 = ssub.s32 %s13, 2
      // Predicated region
      $region57: #{espcn_1d_forward.1} parent=55 // pred_check
        %p1000 = pneg %p194
      $region58: #{espcn_1d_forward.1} parent=55 // pred_check_branch
        %1002 = sbr.rel (%p1000) target = $region60
      $region59: #{espcn_1d_forward.1} parent=55 // pred_region
        %p1003 = scmp.lt.s32.totalorder %s19, 1
        %s1004 = scalar_select %p1003, %s19, 1
        %s1005 = smul.addr %s1004, 4
        %s1006 = scalar_lea.vmem %s7, %s1005
      $region60: #{espcn_1d_forward.1} parent=55 // pred_fallthru
        _
    $region56: #{espcn_1d_forward.1} parent=5 // pred_fallthru
      _
  $region6: #{espcn_1d_forward.1} parent=0 // loop_footer
    %s17 = sadd.s32 1, %s13
  $region7: #{espcn_1d_forward.1} parent=0 // loop_footer_branch
    %12 = sbr.rel target = $region3
  $region8: #{espcn_1d_forward.1} parent=0 // loop_exit
    _

</llo_original>
